<compile_context>
chip_gen: v5e
topology: v5e:2x2
jax: 0.10.0
libtpu: 0.0.40
codegen_flags: <defaults>
</compile_context>

<pallas_src>
import jax
import jax.numpy as jnp
from jax.experimental import pallas as pl
from jax.experimental.pallas import tpu as pltpu


# ----------------------------- kernels --------------------------------------

def _sse_kernel_tiled(w_ref, x_ref, o_ref):
    """Pixel-tiled path. w_ref: (1, C); x_ref/o_ref: (C, T)."""
    x = x_ref[...]
    # 1x1 conv over channels == (1, C) @ (C, T); f32 accumulation on the MXU.
    q = jnp.dot(w_ref[...], x, preferred_element_type=jnp.float32)   # (1, T)
    q = jax.nn.sigmoid(q)
    # Gate: broadcast over channels; multiply in the input dtype so the full
    # tile is never upcast (exact for f32 inputs).
    o_ref[...] = x * q.astype(x.dtype)


def _sse_kernel_batched(w_ref, x_ref, o_ref):
    """Image-batched path (small H*W). w_ref: (C, 1); x_ref/o_ref: (Nb, C, T)."""
    x = x_ref[...]
    w = w_ref[...].astype(jnp.float32)                                # (C, 1)
    # Channel reduction on the VPU/XLU (sublane reduce), all f32 (matches ref).
    q = jnp.sum(x.astype(jnp.float32) * w[None, :, :], axis=1, keepdims=True)
    q = jax.nn.sigmoid(q)                                             # (Nb,1,T)
    o_ref[...] = x * q.astype(x.dtype)


# --------------------------- tiling heuristics -------------------------------

def _vmem_budgets():
    """Generation-aware (vmem_limit_bytes, tile_budget_bytes).

    v5e/v6e have 128 MiB physical VMEM per TensorCore -> large budgets.
    v7x has only 64 MiB per TC -> cap well below half.
    Fallback (unknown device / query failure) uses v7x-safe values, which are
    valid on every generation.
    """
    vmem_cap = 64 << 20
    try:
        info = pltpu.get_tpu_info()
        vmem_cap = int(getattr(info, "vmem_capacity_bytes", vmem_cap))
    except Exception:
        pass
    if vmem_cap >= (96 << 20):        # v5e / v6e class (128 MiB physical)
        return 64 << 20, 40 << 20
    return 40 << 20, 24 << 20         # v7x class (64 MiB physical) / fallback


def _pick_tile_hw(hw, c, itemsize, tile_budget, vmem_limit, *,
                  max_tile=16384, want_split=False):
    """Largest lane tile (multiple of 128) with ~4 in-flight (C, tile) buffers
    (double-buffered input + output) under the tile budget."""
    cap = (tile_budget // max(1, 4 * c * itemsize)) // 128 * 128
    # At very large C, don't let tiles shrink below 512/256 lanes as long as
    # 4 buffers still fit comfortably under the compiler VMEM limit.
    min_tile = 128
    for cand in (512, 256):
        if 4 * c * cand * itemsize <= int(vmem_limit * 0.75):
            min_tile = cand
            break
    cap = max(min_tile, min(max_tile, cap))
    if hw <= cap:
        if want_split and hw >= 256:
            # Keep >=2 grid steps so both v7x TensorCores get work.
            return max(128, ((hw + 1) // 2 + 127) // 128 * 128)
        return hw          # full-extent block is always layout-legal
    return cap             # ragged last tile is masked by Pallas on writeback


def _pick_batch(n, c, hw, itemsize, tile_budget):
    """Images per grid step for the small-H*W path: a divisor of N whose block
    (plus f32 intermediates) stays under budget, keeping >=2 grid steps."""
    per_image = max(1, c * hw * itemsize)
    cap = max(1, tile_budget // (8 * per_image))   # 8x: pipelined I/O + f32 temps
    nb = 1
    for d in range(min(n, cap), 0, -1):
        if n % d == 0:
            nb = d
            break
    if nb == n and n >= 2:                          # keep >=2 steps (v7x: 2 TCs)
        for d in range(n // 2, 0, -1):
            if n % d == 0:
                nb = d
                break
    return nb


# ------------------------------ wrapper --------------------------------------

_SMALL_HW = 512   # below this, batch images per grid step instead of tiling pixels


def sse_forward(x_nchw, weight, *, tile_hw=None):
    """sSE forward: out = U * sigmoid(Conv1x1(U)), Conv2d(C -> 1, k=1, no bias).

    Args:
      x_nchw: (N, C, H, W) input.
      weight: (1, C, 1, 1) Conv2d 1x1 weight (no bias).
      tile_hw: optional pixel-tile override (testing / tuning).

    Returns:
      (N, C, H, W) output, same dtype as the input.
    """
    N, C, H, W = x_nchw.shape
    HW = H * W
    dtype = x_nchw.dtype
    itemsize = jnp.dtype(dtype).itemsize
    vmem_limit, tile_budget = _vmem_budgets()

    # Free, contiguous reshape: NCHW -> (N, C, H*W). No transposes, no padding.
    x = x_nchw.reshape(N, C, HW)

    use_tiled = (tile_hw is not None) or (HW >= _SMALL_HW) or (N == 1)

    if use_tiled:
        # Pixel-tiled path: channels on sublanes, pixels on lanes.
        w = weight.reshape(1, C).astype(dtype)   # bf16 weight quantization; acc stays f32
        if tile_hw is None:
            tile_hw = _pick_tile_hw(HW, C, itemsize, tile_budget, vmem_limit,
                                    want_split=(N == 1))
        grid = (N, pl.cdiv(HW, tile_hw))
        out = pl.pallas_call(
            _sse_kernel_tiled,
            out_shape=jax.ShapeDtypeStruct((N, C, HW), dtype),
            grid_spec=pltpu.PrefetchScalarGridSpec(
                num_scalar_prefetch=0,
                grid=grid,
                in_specs=[
                    pl.BlockSpec((1, C), lambda n, t: (0, 0)),                 # weight (VMEM-resident)
                    pl.BlockSpec((None, C, tile_hw), lambda n, t: (n, 0, t)),  # pixel tile
                ],
                out_specs=pl.BlockSpec((None, C, tile_hw), lambda n, t: (n, 0, t)),
            ),
            compiler_params=pltpu.CompilerParams(
                dimension_semantics=("parallel", "parallel"),
                vmem_limit_bytes=vmem_limit,
            ),
        )(w, x)
    else:
        # Small feature maps: block several images per grid step to amortize
        # per-step overhead and issue one larger DMA per step.
        wc = weight.reshape(C, 1).astype(dtype)
        nb = _pick_batch(N, C, HW, itemsize, tile_budget)
        grid = (N // nb,)
        out = pl.pallas_call(
            _sse_kernel_batched,
            out_shape=jax.ShapeDtypeStruct((N, C, HW), dtype),
            grid_spec=pltpu.PrefetchScalarGridSpec(
                num_scalar_prefetch=0,
                grid=grid,
                in_specs=[
                    pl.BlockSpec((C, 1), lambda n: (0, 0)),          # weight (VMEM-resident)
                    pl.BlockSpec((nb, C, HW), lambda n: (n, 0, 0)),  # image batch
                ],
                out_specs=pl.BlockSpec((nb, C, HW), lambda n: (n, 0, 0)),
            ),
            compiler_params=pltpu.CompilerParams(
                dimension_semantics=("parallel",),
                vmem_limit_bytes=vmem_limit,
            ),
        )(wc, x)

    return out.reshape(N, C, H, W)


def sse_reference(x_nchw, weight):
    """Pure-JAX reference matching the PyTorch module (f32 math)."""
    w = weight.reshape(1, -1, 1, 1).astype(jnp.float32)
    q = jnp.sum(x_nchw.astype(jnp.float32) * w, axis=1, keepdims=True)
    q = jax.nn.sigmoid(q)
    return (x_nchw.astype(jnp.float32) * q).astype(x_nchw.dtype)


# ------------------------------- tests ---------------------------------------

if __name__ == "__main__":
    key = jax.random.PRNGKey(0)

    def make_case(k, n, c, h, w, dtype):
        kx, kw = jax.random.split(k)
        x = jax.random.normal(kx, (n, c, h, w), dtype=jnp.float32).astype(dtype)
        fan = 1.0 / (c ** 0.5)
        wt = jax.random.uniform(kw, (1, c, 1, 1), dtype=jnp.float32,
                                minval=-fan, maxval=fan)
        return x, wt

    keys = jax.random.split(key, 4)

    # 1) Primary case from the module spec: batch=2, channels=4, spatial=16x16.
    x, wt = make_case(keys[0], 2, 4, 16, 16, jnp.float32)
    out = jax.block_until_ready(sse_forward(x, wt))
    ref = sse_reference(x, wt)
    assert out.shape == x.shape and out.dtype == x.dtype
    assert jnp.allclose(out, ref, atol=1e-5, rtol=1e-5), (
        float(jnp.max(jnp.abs(out - ref))))

    # 2) Larger map -> pixel-tiled (MXU) path.
    x, wt = make_case(keys[1], 2, 4, 32, 32, jnp.float32)
    out = jax.block_until_ready(sse_forward(x, wt))
    ref = sse_reference(x, wt)
    assert jnp.allclose(out, ref, atol=1e-5, rtol=1e-5), (
        float(jnp.max(jnp.abs(out - ref))))

    # 3) H*W not a multiple of 128 with a forced small tile -> exercises the
    #    ragged-last-tile write masking on the tiled path.
    x, wt = make_case(keys[2], 2, 4, 18, 18, jnp.float32)   # HW = 324
    out = jax.block_until_ready(sse_forward(x, wt, tile_hw=128))
    ref = sse_reference(x, wt)
    assert jnp.allclose(out, ref, atol=1e-5, rtol=1e-5), (
        float(jnp.max(jnp.abs(out - ref))))

    # 4) bf16 activations -> batched small-map path, low-precision gating.
    x, wt = make_case(keys[3], 2, 8, 16, 16, jnp.bfloat16)
    out = jax.block_until_ready(sse_forward(x, wt))
    ref = sse_reference(x, wt)
    diff = float(jnp.max(jnp.abs(out.astype(jnp.float32) - ref.astype(jnp.float32))))
    assert out.dtype == jnp.bfloat16 and diff < 5e-2, diff

    print("KERNEL_OK")
</pallas_src>

<mosaic_0001>
module attributes {stable_mosaic.version = 11 : i64} {
  func.func @_sse_kernel_batched(%arg0: i32, %arg1: memref<4x1xf32, #tpu.memory_space<vmem>>, %arg2: memref<1x4x256xf32, #tpu.memory_space<vmem>>, %arg3: memref<1x4x256xf32, #tpu.memory_space<vmem>>) attributes {dimension_semantics = [#tpu.dimension_semantics<parallel>], iteration_bounds = array<i64: 2>, scalar_prefetch = 0 : i64, scratch_operands = 0 : i64, tpu.core_type = #tpu.core_type<tc>, window_params = [{pipeline_mode = #tpu.pipeline_mode<synchronous>, transform_indices = @transform_0, window_bounds = array<i64: 4, 1>}, {transform_indices = @transform_1, window_bounds = array<i64: 1, 4, 256>}, {transform_indices = @transform_2, window_bounds = array<i64: 1, 4, 256>}]} {
    %c0 = arith.constant 0 : index
    %c0_0 = arith.constant 0 : index
    %c0_1 = arith.constant 0 : index
    %0 = vector.load %arg2[%c0, %c0_0, %c0_1] : memref<1x4x256xf32, #tpu.memory_space<vmem>>, vector<1x4x256xf32>
    %c0_2 = arith.constant 0 : index
    %c0_3 = arith.constant 0 : index
    %1 = vector.load %arg1[%c0_2, %c0_3] : memref<4x1xf32, #tpu.memory_space<vmem>>, vector<4x1xf32>
    %2 = vector.shape_cast %1 : vector<4x1xf32> to vector<1x4x1xf32>
    %3 = vector.broadcast %2 : vector<1x4x1xf32> to vector<1x4x256xf32>
    %4 = arith.mulf %0, %3 : vector<1x4x256xf32>
    %cst = arith.constant dense<0.000000e+00> : vector<1x256xf32>
    %5 = vector.multi_reduction <add>, %4, %cst [1] : vector<1x4x256xf32> to vector<1x256xf32>
    %6 = vector.shape_cast %5 : vector<1x256xf32> to vector<1x1x256xf32>
    %7 = arith.negf %6 : vector<1x1x256xf32>
    %8 = math.exp %7 : vector<1x1x256xf32>
    %cst_4 = arith.constant 1.000000e+00 : f32
    %9 = vector.broadcast %cst_4 : f32 to vector<1x1x256xf32>
    %10 = arith.addf %9, %8 : vector<1x1x256xf32>
    %11 = arith.divf %9, %10 : vector<1x1x256xf32>
    %12 = vector.broadcast %11 : vector<1x1x256xf32> to vector<1x4x256xf32>
    %13 = arith.mulf %0, %12 : vector<1x4x256xf32>
    %c0_5 = arith.constant 0 : index
    %c0_6 = arith.constant 0 : index
    %c0_7 = arith.constant 0 : index
    %14 = vector.load %arg3[%c0_5, %c0_6, %c0_7] : memref<1x4x256xf32, #tpu.memory_space<vmem>>, vector<1x4x256xf32>
    tpu.vector_store %arg3[%c0_5, %c0_6, %c0_7], %13 {strides = array<i32>} : memref<1x4x256xf32, #tpu.memory_space<vmem>>, vector<1x4x256xf32>,
    return
  }
  func.func @transform_0(%arg0: i32) -> (i32, i32) {
    %c0_i32 = arith.constant 0 : i32
    %c0_i32_0 = arith.constant 0 : i32
    %c0_i32_1 = arith.constant 0 : i32
    return %c0_i32, %c0_i32_0 : i32, i32
  }
  func.func @transform_1(%arg0: i32) -> (i32, i32, i32) {
    %c0_i32 = arith.constant 0 : i32
    %c0_i32_0 = arith.constant 0 : i32
    %c0_i32_1 = arith.constant 0 : i32
    return %arg0, %c0_i32, %c0_i32_0 : i32, i32, i32
  }
  func.func @transform_2(%arg0: i32) -> (i32, i32, i32) {
    %c0_i32 = arith.constant 0 : i32
    %c0_i32_0 = arith.constant 0 : i32
    %c0_i32_1 = arith.constant 0 : i32
    return %arg0, %c0_i32, %c0_i32_0 : i32, i32, i32
  }
}

</mosaic_0001>

<llo_original>
// kernel: tpu_custom_call.1
$region0: #{tpu_custom_call.1}
  #allocation0 [shape = 'u32[]', space=smem, size = 0x4, offset = 0x4, fixed_abs, tag = 'smem constant byte address 0x4 - core index']
  #allocation1 [shape = 'u32[72,128]{1,0:T(1,128)}', space=vmem, size = 0x9000, scoped, tag = 'internal scratch']
  %s0 = inlined_call_operand.vmem [shape: f32[4,1], index: 0, kind: input, shape index: {}]
  %s1 = inlined_call_operand.hbm [shape: f32[2,4,256], index: 1, kind: input, shape index: {}]
  %s2 = inlined_call_operand.hbm [shape: f32[2,4,256], index: 2, kind: output, shape index: {}]
  %s3 = sld [smem:[#allocation0]]
  $region45: #{tpu_custom_call.1} parent=0
    _
  %s5 = ssub.s32 1, %s3
  %s6 = scalar_select 0, %s5, %s3
  $region1: #{tpu_custom_call.1} parent=0
    #allocation2 [shape = 'u8[8192]{0}', space=vmem, size = 0x2000, scoped, tag = 'input window, operand 1']
    #allocation3 [shape = 's32[2]{0}', space=sflag, size = 0x8, scoped, tag = 'scoped memory for tpu_custom_call.1']
    #allocation4 [shape = 's32[2]{0}', space=sflag, size = 0x8, scoped, tag = 'scoped memory for tpu_custom_call.1']
    #allocation5 [shape = 'u8[8192]{0}', space=vmem, size = 0x2000, scoped, tag = 'output window, operand 0']
    %7 = vsyncpa [#allocation3], 0
    %s8 = scalar_lea.sflag [#allocation3], 1
    %9 = vsyncpa %s8, 0
    %10 = vsyncpa [#allocation4], 0
    %s11 = scalar_lea.sflag [#allocation4], 1
    %12 = vsyncpa %s11, 0
    loop: start=0, step=1, limit=4
    $region2: #{tpu_custom_call.1} parent=1 // loop_pre_header
      _
    $region3: #{tpu_custom_call.1} parent=1 // loop_header
      %s14 = sphi 0, %s18
      %p15 = scmp.ge.s32.totalorder %s14, 4
      %s22 = sphi 0, %s22
      %s24 = sphi 0, %s22
      %s25 = sphi 0, %s24
      %s39 = sphi 0, %s25
      %s45 = sphi 0, %s47
      %s48 = sphi 0, %s45
      %s49 = sphi 0, %s48
      %s65 = sphi 0, %s49
      %s71 = sphi 0, %s73
      %s74 = sphi 0, %s71
      %s75 = sphi 0, %s74
      %s91 = sphi 0, %s75
    $region4: #{tpu_custom_call.1} parent=1 // loop_header_branch
      %17 = sbr.rel (%p15) target = $region8
    $region5: #{tpu_custom_call.1} parent=1 // loop_body
      %s19 = ssub.s32 %s14, 1
      %s20 = ssub.s32 %s14, 2
      %s21 = sadd.s32 %s14, 1
      %s23 = sadd.s32 %s22, 1
      %p26 = scmp.eq.s32.totalorder %s14, 1
      %p27 = scmp.ne.s32.totalorder %s22, %s24
      %p28 = scmp.eq.s32.totalorder %s14, 0
      %p29 = por %p27, %p28
      %p30 = scmp.ne.s32.totalorder %s22, %s24
      %p31 = scmp.eq.s32.totalorder %s19, 1
      %p32 = por %p30, %p31
      %p33 = scmp.ne.s32.totalorder %s24, %s25
      %p34 = scmp.eq.s32.totalorder %s19, 0
      %p35 = por %p33, %p34
      %p36 = scmp.ne.s32.totalorder %s24, %s25
      %p37 = scmp.eq.s32.totalorder %s20, 1
      %p38 = por %p36, %p37
      %p40 = scmp.ne.s32.totalorder %s25, %s39
      %p41 = scmp.eq.s32.totalorder %s20, 0
      %p42 = por %p40, %p41
      %s43 = ssub.s32 %s14, %s21
      %p44 = scmp.eq.s32.totalorder %s43, 0
      %s46 = sadd.s32 %s45, 1
      %s47 = scalar_select %p44, %s45, %s46
      %p50 = pneg %p44
      %p51 = scmp.eq.s32.totalorder %s14, 1
      %p52 = por %p50, %p51
      %p53 = scmp.ne.s32.totalorder %s45, %s48
      %p54 = scmp.eq.s32.totalorder %s14, 0
      %p55 = por %p53, %p54
      %p56 = scmp.ne.s32.totalorder %s45, %s48
      %p57 = scmp.eq.s32.totalorder %s19, 1
      %p58 = por %p56, %p57
      %p59 = scmp.ne.s32.totalorder %s48, %s49
      %p60 = scmp.eq.s32.totalorder %s19, 0
      %p61 = por %p59, %p60
      %p62 = scmp.ne.s32.totalorder %s48, %s49
      %p63 = scmp.eq.s32.totalorder %s20, 1
      %p64 = por %p62, %p63
      %p66 = scmp.ne.s32.totalorder %s49, %s65
      %p67 = scmp.eq.s32.totalorder %s20, 0
      %p68 = por %p66, %p67
      %s69 = ssub.s32 %s14, %s21
      %p70 = scmp.eq.s32.totalorder %s69, 0
      %s72 = sadd.s32 %s71, 1
      %s73 = scalar_select %p70, %s71, %s72
      %p76 = pneg %p70
      %p77 = scmp.eq.s32.totalorder %s14, 1
      %p78 = por %p76, %p77
      %p79 = scmp.ne.s32.totalorder %s71, %s74
      %p80 = scmp.eq.s32.totalorder %s14, 0
      %p81 = por %p79, %p80
      %p82 = scmp.ne.s32.totalorder %s71, %s74
      %p83 = scmp.eq.s32.totalorder %s19, 1
      %p84 = por %p82, %p83
      %p85 = scmp.ne.s32.totalorder %s74, %s75
      %p86 = scmp.eq.s32.totalorder %s19, 0
      %p87 = por %p85, %p86
      %p88 = scmp.ne.s32.totalorder %s74, %s75
      %p89 = scmp.eq.s32.totalorder %s20, 1
      %p90 = por %p88, %p89
      %p92 = scmp.ne.s32.totalorder %s75, %s91
      %p93 = scmp.eq.s32.totalorder %s20, 0
      %p94 = por %p92, %p93
      %p95 = scmp.le.s32.totalorder 1, %s14
      %p96 = scmp.lt.s32.totalorder %s14, 3
      %p97 = pnand %p95, %p96
      %p98 = pneg %p97
      // Predicated region
      $region9: #{tpu_custom_call.1} parent=5 // pred_check
        _
      $region10: #{tpu_custom_call.1} parent=5 // pred_check_branch
        %100 = sbr.rel (%p97) target = $region12
      $region11: #{tpu_custom_call.1} parent=5 // pred_region
        %s101 = ssub.s32 %s14, 1
        // Predicated region
        $region13: #{tpu_custom_call.1} parent=11 // pred_check
          %p102 = pneg %p35
        $region14: #{tpu_custom_call.1} parent=11 // pred_check_branch
          %104 = sbr.rel (%p102) target = $region16
        $region15: #{tpu_custom_call.1} parent=11 // pred_region
          _
        $region16: #{tpu_custom_call.1} parent=11 // pred_fallthru
          _
      $region12: #{tpu_custom_call.1} parent=5 // pred_fallthru
        _
      %p105 = scmp.lt.s32.totalorder %s14, 2
      // Predicated region
      $region17: #{tpu_custom_call.1} parent=5 // pred_check
        %p106 = pneg %p105
      $region18: #{tpu_custom_call.1} parent=5 // pred_check_branch
        %108 = sbr.rel (%p106) target = $region20
      $region19: #{tpu_custom_call.1} parent=5 // pred_region
        // Predicated region
        $region21: #{tpu_custom_call.1} parent=19 // pred_check
          %p109 = pneg %p55
        $region22: #{tpu_custom_call.1} parent=19 // pred_check_branch
          %111 = sbr.rel (%p109) target = $region24
        $region23: #{tpu_custom_call.1} parent=19 // pred_region
          %s112 = sand.u32 %s45, 1
          %s113 = scalar_lea.sflag [#allocation3], %s112
          %s114 = sand.u32 %s45, 1
          %s115 = smul.addr %s114, 8
          %s116 = scalar_lea.vmem [#allocation2], %s115
          %118 = vsyncadd %s113, 0
          %s119 = smul.addr %s14, 2
          %s120 = smul.addr %s119, 4
          %s121 = scalar_lea.hbm %s1, %s120
          %s123 = sshll.u32 %s121, 4
          %s124 = int_to_ptr.hbm [resolvable:$true] %s123
          %s125 = sshll.u32 %s116, 4
          %s126 = int_to_ptr.vmem [resolvable:$true] %s125
          %128 = dma.hbm_to_vmem [thread:$0]  %s124, 128, %s126, %s113
        $region24: #{tpu_custom_call.1} parent=19 // pred_fallthru
          _
      $region20: #{tpu_custom_call.1} parent=5 // pred_fallthru
        _
      %p129 = scmp.le.s32.totalorder 1, %s14
      %p130 = scmp.lt.s32.totalorder %s14, 3
      %p131 = pnand %p129, %p130
      %p132 = pneg %p131
      // Predicated region
      $region25: #{tpu_custom_call.1} parent=5 // pred_check
        _
      $region26: #{tpu_custom_call.1} parent=5 // pred_check_branch
        %134 = sbr.rel (%p131) target = $region28
      $region27: #{tpu_custom_call.1} parent=5 // pred_region
        %s135 = ssub.s32 %s14, 1
        %s136 = sand.u32 %s48, 1
        %s137 = scalar_lea.sflag [#allocation3], %s136
        %s138 = sand.u32 %s48, 1
        %s139 = smul.addr %s138, 8
        %s140 = scalar_lea.vmem [#allocation2], %s139
        // Predicated region
        $region29: #{tpu_custom_call.1} parent=27 // pred_check
          %p141 = pneg %p61
        $region30: #{tpu_custom_call.1} parent=27 // pred_check_branch
          %143 = sbr.rel (%p141) target = $region32
        $region31: #{tpu_custom_call.1} parent=27 // pred_region
          %145 = dma.done %s137, 128
        $region32: #{tpu_custom_call.1} parent=27 // pred_fallthru
          _
        %p146 = pneg %p35
        %p147 = pneg %p32
        %s148 = sand.u32 %s48, 1
        %s149 = scalar_lea.sflag [#allocation3], %s148
        %s150 = sand.u32 %s48, 1
        %s151 = smul.addr %s150, 8
        %s152 = scalar_lea.vmem [#allocation2], %s151
        %p153 = pneg %p61
        %p154 = pneg %p58
        %p155 = pneg %p87
        %p156 = pneg %p84
        %s157 = sand.u32 %s74, 1
        %s158 = scalar_lea.sflag [#allocation4], %s157
        %s159 = sand.u32 %s74, 1
        %s160 = smul.addr %s159, 8
        %s161 = scalar_lea.vmem [#allocation5], %s160
        %v162 = vld [vmem:[%s140] sm:$0xff]
        %v163 = vld [vmem:[%s0] sm:$0xf]
        %165 = vset.pattern.permute.xlu0 0
        %166 = vperm.xlu0 %165, %v163
        %v167 = vpop.permute.xlu0 %166
        %v169 = vunpack.c.l.s4 839922192
        %v170 = vunpack.c.0.s8 %v169
        %v171 = vperm.slane %v167, %v170
        %v173 = vmul.f32 %v162, %v171
        %175 = vst [vmem:[#allocation1] ss:$2 sm:$0xff] %v173
        %v176 = vld.sshfl [vmem:[#allocation1] sm:$0xff pattern:$0x75316420]
        %v177 = vld.sshfl [vmem:[#allocation1 + $0x8] sm:$0xff pattern:$0x75316420]
        %vm180 = vcmask 1043456
        %v181 = vsel %vm180, %v176, 0.0
        %v182 = vrot.slane %v181, 4
        %v183 = vadd.f32 %v181, %v182
        %v184 = vrot.slane %v183, 2
        %v185 = vadd.f32 %v183, %v184
        %v186 = vrot.slane %v185, 1
        %v187 = vadd.f32 %v185, %v186
        %v188 = vsel %vm180, %v177, 0.0
        %v189 = vrot.slane %v188, 4
        %v190 = vadd.f32 %v188, %v189
        %v191 = vrot.slane %v190, 2
        %v192 = vadd.f32 %v190, %v191
        %v193 = vrot.slane %v192, 1
        %v194 = vadd.f32 %v192, %v193
        %v195 = vxor.u32 %v187, 2147483648
        %v196 = vxor.u32 %v194, 2147483648
        %v197 = vmul.f32 %v195, 1.442695
        %v198 = vpow.pop %v197
        %v199 = vmul.f32 %v196, 1.442695
        %v200 = vpow.pop %v199
        %v201 = vadd.f32 %v198, 1.0
        %v202 = vadd.f32 %v200, 1.0
        %v203 = vrcp.pop %v201
        %v204 = vmul.f32 %v201, %v203
        %v205 = vsub.f32 1.0, %v204
        %v206 = vmul.f32 %v203, %v205
        %v207 = vadd.f32 %v203, %v206
        %vm208 = vweird.f32 %v201
        %vm209 = vweird.f32 %v203
        %vm210 = vmor %vm208, %vm209
        %v211 = vsel %vm210, %v203, %v207
        %v212 = vand.u32 2147483647, %v201
        %vm213 = vcmp.eq.f32.partialorder %v212, 8.507059e+37
        %v214 = vand.u32 %v201, 2147483648
        %v215 = vor.u32 1.1754944e-38, %v214
        %v216 = vsel %vm213, %v215, %v211
        %v217 = vmul.f32 1.0, %v216
        %v218 = vrcp.pop %v202
        %v219 = vmul.f32 %v202, %v218
        %v220 = vsub.f32 1.0, %v219
        %v221 = vmul.f32 %v218, %v220
        %v222 = vadd.f32 %v218, %v221
        %vm223 = vweird.f32 %v202
        %vm224 = vweird.f32 %v218
        %vm225 = vmor %vm223, %vm224
        %v226 = vsel %vm225, %v218, %v222
        %v227 = vand.u32 2147483647, %v202
        %vm228 = vcmp.eq.f32.partialorder %v227, 8.507059e+37
        %v229 = vand.u32 %v202, 2147483648
        %v230 = vor.u32 1.1754944e-38, %v229
        %v231 = vsel %vm228, %v230, %v226
        %v232 = vmul.f32 1.0, %v231
        %v235 = vrot.slane %v232, 4
        %v236 = vsel %vm180, %v217, %v235
        %v238 = vmul.f32 %v162, %v236
        %239 = vst [vmem:[%s161] sm:$0xff] %v238
        %s240 = sand.u32 %s74, 1
        %s241 = scalar_lea.sflag [#allocation4], %s240
        %s242 = sand.u32 %s74, 1
        %s243 = smul.addr %s242, 8
        %s244 = scalar_lea.vmem [#allocation5], %s243
        // Predicated region
        $region33: #{tpu_custom_call.1} parent=27 // pred_check
          %p245 = pneg %p84
        $region34: #{tpu_custom_call.1} parent=27 // pred_check_branch
          %247 = sbr.rel (%p245) target = $region36
        $region35: #{tpu_custom_call.1} parent=27 // pred_region
          %249 = vsyncadd %s241, 0
          %s250 = smul.addr %s19, 2
          %s251 = smul.addr %s250, 4
          %s252 = scalar_lea.hbm %s2, %s251
          %s254 = sshll.u32 %s244, 4
          %s255 = int_to_ptr.vmem [resolvable:$true] %s254
          %s256 = sshll.u32 %s252, 4
          %s257 = int_to_ptr.hbm [resolvable:$true] %s256
          %259 = dma.vmem_to_hbm [thread:$0]  %s255, 128, %s257, %s241
        $region36: #{tpu_custom_call.1} parent=27 // pred_fallthru
          _
      $region28: #{tpu_custom_call.1} parent=5 // pred_fallthru
        _
      %p260 = scmp.le.s32.totalorder 2, %s14
      // Predicated region
      $region37: #{tpu_custom_call.1} parent=5 // pred_check
        %p261 = pneg %p260
      $region38: #{tpu_custom_call.1} parent=5 // pred_check_branch
        %263 = sbr.rel (%p261) target = $region40
      $region39: #{tpu_custom_call.1} parent=5 // pred_region
        %s264 = ssub.s32 %s14, 2
        // Predicated region
        $region41: #{tpu_custom_call.1} parent=39 // pred_check
          %p265 = pneg %p90
        $region42: #{tpu_custom_call.1} parent=39 // pred_check_branch
          %267 = sbr.rel (%p265) target = $region44
        $region43: #{tpu_custom_call.1} parent=39 // pred_region
          %s268 = sand.u32 %s75, 1
          %s269 = scalar_lea.sflag [#allocation4], %s268
          %s270 = sand.u32 %s75, 1
          %s271 = smul.addr %s270, 8
          %s272 = scalar_lea.vmem [#allocation5], %s271
          %274 = dma.done %s269, 128
        $region44: #{tpu_custom_call.1} parent=39 // pred_fallthru
          _
      $region40: #{tpu_custom_call.1} parent=5 // pred_fallthru
        _
    $region6: #{tpu_custom_call.1} parent=1 // loop_footer
      %s18 = sadd.s32 1, %s14
    $region7: #{tpu_custom_call.1} parent=1 // loop_footer_branch
      %13 = sbr.rel target = $region3
    $region8: #{tpu_custom_call.1} parent=1 // loop_exit
      _
    %275 = vsyncpa [#allocation3], 1
    %s276 = scalar_lea.sflag [#allocation3], 1
    %277 = vsyncpa %s276, 1
    %278 = vsyncpa [#allocation4], 1
    %s279 = scalar_lea.sflag [#allocation4], 1
    %280 = vsyncpa %s279, 1

</llo_original>
